<compile_context>
chip_gen: v5e
topology: v5e:2x2
jax: 0.10.0
libtpu: 0.0.40
codegen_flags: <defaults>
</compile_context>

<pallas_src>
import jax
import jax.numpy as jnp
from jax.experimental import pallas as pl
from jax.experimental.pallas import tpu as pltpu


def _quat_mat_entries(q):
    """The 9 entries of R(q) (pytorch3d convention), each shaped (tb, 1)."""
    r = q[:, 0:1]
    i = q[:, 1:2]
    j = q[:, 2:3]
    k = q[:, 3:4]
    two_s = 2.0 / jnp.sum(q * q, axis=-1, keepdims=True)  # (tb, 1)

    m00 = 1.0 - two_s * (j * j + k * k)
    m01 = two_s * (i * j - k * r)
    m02 = two_s * (i * k + j * r)
    m10 = two_s * (i * j + k * r)
    m11 = 1.0 - two_s * (i * i + k * k)
    m12 = two_s * (j * k - i * r)
    m20 = two_s * (i * k - j * r)
    m21 = two_s * (j * k + i * r)
    m22 = 1.0 - two_s * (i * i + j * j)
    return m00, m01, m02, m10, m11, m12, m20, m21, m22


def add_loss_kernel(pred_ref, gt_ref, pt_ref, out_ref, acc_ref):
    ni = pl.program_id(1)

    # Reset the wide accumulator at the start of each batch tile's N-loop.
    @pl.when(ni == 0)
    def _():
        acc_ref[...] = jnp.zeros_like(acc_ref)

    pred = pred_ref[...].astype(jnp.float32)        # (tb, 4)
    gt = gt_ref[...].astype(jnp.float32)            # (tb, 4)
    # standardize_quaternion: flip sign so the real part is non-negative.
    gt = jnp.where(gt[:, 0:1] < 0.0, -gt, gt)

    # Delta rotation matrix D = R(pred) - R(gt); 9 entries, each (tb, 1).
    mp = _quat_mat_entries(pred)
    mg = _quat_mat_entries(gt)
    d00, d01, d02, d10, d11, d12, d20, d21, d22 = tuple(
        a - b for a, b in zip(mp, mg)
    )

    # Dense (tb, tn) coordinate planes (lane dim = point index).
    px = pt_ref[0]
    py = pt_ref[1]
    pz = pt_ref[2]

    # Single row-vector apply:  (p @ R_pred) - (p @ R_gt) == p @ D.
    dx = px * d00 + py * d10 + pz * d20
    dy = px * d01 + py * d11 + pz * d21
    dz = px * d02 + py * d12 + pz * d22
    nrm = jnp.sqrt(dx * dx + dy * dy + dz * dz)     # (tb, tn)

    acc_ref[...] += nrm  # pure-VPU accumulation; no per-step XLU reduce

    # Finalize this batch tile: one reduce, broadcast into its own output
    # block (lane-dense unmasked store, written exactly once per batch tile).
    @pl.when(ni == pl.num_programs(1) - 1)
    def _():
        s = jnp.sum(acc_ref[...], keepdims=True)    # (1, 1)
        out_ref[...] = jnp.broadcast_to(s, out_ref.shape)


def _pick_tile_b(B, max_tile=32):
    if B % 8 != 0 or B <= max_tile:
        return B
    best = 8
    t = 8
    while t <= max_tile:
        if B % t == 0:
            best = t
        t += 8
    return best


def _pick_tile_n(N, max_tile=2048):
    if N <= max_tile or N % 128 != 0:
        return N
    best = 128
    t = 128
    while t <= max_tile:
        if N % t == 0:
            best = t
        t += 128
    return best


def add_loss_single_quat_mode(pred, gt, point, tile_b=None, tile_n=None):
    """Pallas implementation of ADDLossSingleQuatMode.forward((pred, gt, point))."""
    B, N, _ = point.shape
    if tile_b is None:
        tile_b = _pick_tile_b(B)
    if tile_n is None:
        tile_n = _pick_tile_n(N)
    assert B % tile_b == 0, "batch must be divisible by tile_b"
    assert N % tile_n == 0, "num points must be divisible by tile_n"
    assert tile_b == B or tile_b % 8 == 0
    assert tile_n == N or tile_n % 128 == 0

    # TODO(synk): ideally the producer emits points already in (3, B, N) layout;
    # this standalone transpose adds one extra HBM read+write of the point tensor.
    pts_t = jnp.transpose(point, (2, 0, 1)).astype(jnp.float32)  # (3, B, N)
    pred = pred.astype(jnp.float32)
    gt = gt.astype(jnp.float32)

    grid_b = B // tile_b
    grid_n = N // tile_n

    # One (8, 128) partial-sum block per batch tile (padded so block dims are
    # hardware-aligned); every entry of a block holds that tile's partial sum.
    partials = pl.pallas_call(
        add_loss_kernel,
        out_shape=jax.ShapeDtypeStruct((grid_b * 8, 128), jnp.float32),
        grid_spec=pltpu.PrefetchScalarGridSpec(
            num_scalar_prefetch=0,
            grid=(grid_b, grid_n),
            in_specs=[
                # Quaternions: small per-batch-tile blocks, refetched only
                # when the batch tile changes.
                pl.BlockSpec((tile_b, 4), lambda bi, ni: (bi, 0)),
                pl.BlockSpec((tile_b, 4), lambda bi, ni: (bi, 0)),
                # Points: (3, tile_b, tile_n) blocks, streamed/double-buffered.
                pl.BlockSpec((3, tile_b, tile_n), lambda bi, ni: (0, bi, ni)),
            ],
            out_specs=pl.BlockSpec((8, 128), lambda bi, ni: (bi, 0)),
            scratch_shapes=[pltpu.VMEM((tile_b, tile_n), jnp.float32)],
        ),
        compiler_params=pltpu.CompilerParams(
            # Batch axis is independent across blocks -> megacore-shardable
            # on v7x; the N axis is the in-block reduction.
            dimension_semantics=("parallel", "arbitrary"),
            vmem_limit_bytes=32 * 1024 * 1024,  # safe on v5e/v6e/v7x
        ),
    )(pred, gt, pts_t)

    # Tiny final reduction over per-batch-tile partials + mean scaling.
    per_block = partials.reshape(grid_b, 8, 128)[:, 0, 0]
    return jnp.sum(per_block) / jnp.float32(B * N)


# ---------------- pure-JAX reference (mirrors the PyTorch code) ----------------
def _quat_to_mat_ref(q):
    r, i, j, k = q[..., 0], q[..., 1], q[..., 2], q[..., 3]
    two_s = 2.0 / jnp.sum(q * q, axis=-1)
    o = jnp.stack(
        [
            1 - two_s * (j * j + k * k),
            two_s * (i * j - k * r),
            two_s * (i * k + j * r),
            two_s * (i * j + k * r),
            1 - two_s * (i * i + k * k),
            two_s * (j * k - i * r),
            two_s * (i * k - j * r),
            two_s * (j * k + i * r),
            1 - two_s * (i * i + j * j),
        ],
        axis=-1,
    )
    return o.reshape(q.shape[:-1] + (3, 3))


def add_loss_reference(pred, gt, point):
    gt = jnp.where(gt[:, 0:1] < 0.0, -gt, gt)
    B, N, _ = point.shape
    p = point.reshape(-1, 3)[:, None, :]           # (B*N, 1, 3)
    gt_r = jnp.repeat(gt, N, axis=0)               # (B*N, 4)
    pr_r = jnp.repeat(pred, N, axis=0)             # (B*N, 4)
    point_gt = jnp.matmul(p, _quat_to_mat_ref(gt_r))[:, 0, :]
    point_pred = jnp.matmul(p, _quat_to_mat_ref(pr_r))[:, 0, :]
    return jnp.mean(jnp.linalg.norm(point_pred - point_gt, axis=1))


if __name__ == "__main__":
    key = jax.random.PRNGKey(0)
    k1, k2, k3 = jax.random.split(key, 3)

    B, N = 16, 512
    pred = jax.random.normal(k1, (B, 4), dtype=jnp.float32)
    pred = pred / jnp.linalg.norm(pred, axis=-1, keepdims=True)
    gt = jax.random.normal(k2, (B, 4), dtype=jnp.float32)
    gt = gt / jnp.linalg.norm(gt, axis=-1, keepdims=True)
    point = jax.random.normal(k3, (B, N, 3), dtype=jnp.float32)

    # Explicit small tiles so the multi-block grid (init / accumulate /
    # finalize and multi-partial reduction paths) is exercised at demo size.
    out = add_loss_single_quat_mode(pred, gt, point, tile_b=8, tile_n=256)
    out = jax.block_until_ready(out)

    ref = add_loss_reference(pred, gt, point)
    assert jnp.allclose(out, ref, rtol=1e-4, atol=1e-5), (out, ref)

    print("KERNEL_OK")
</pallas_src>

<mosaic_0001>
module attributes {stable_mosaic.version = 11 : i64} {
  func.func @add_loss_kernel(%arg0: i32, %arg1: i32, %arg2: memref<8x4xf32, #tpu.memory_space<vmem>>, %arg3: memref<8x4xf32, #tpu.memory_space<vmem>>, %arg4: memref<3x8x256xf32, #tpu.memory_space<vmem>>, %arg5: memref<8x128xf32, #tpu.memory_space<vmem>>, %arg6: memref<8x256xf32, #tpu.memory_space<vmem>>) attributes {dimension_semantics = [#tpu.dimension_semantics<parallel>, #tpu.dimension_semantics<arbitrary>], iteration_bounds = array<i64: 2, 2>, scalar_prefetch = 0 : i64, scratch_operands = 1 : i64, tpu.core_type = #tpu.core_type<tc>, window_params = [{transform_indices = @transform_0, window_bounds = array<i64: 8, 4>}, {transform_indices = @transform_1, window_bounds = array<i64: 8, 4>}, {transform_indices = @transform_2, window_bounds = array<i64: 3, 8, 256>}, {transform_indices = @transform_3, window_bounds = array<i64: 8, 128>}]} {
    %c0_i32 = arith.constant 0 : i32
    %0 = arith.cmpi eq, %arg1, %c0_i32 : i32
    %1 = arith.extui %0 : i1 to i32
    %c0_i32_0 = arith.constant 0 : i32
    %2 = arith.cmpi ne, %1, %c0_i32_0 : i32
    scf.if %2 {
      %cst_27 = arith.constant 0.000000e+00 : f32
      %166 = vector.broadcast %cst_27 : f32 to vector<8x256xf32>
      %c0_28 = arith.constant 0 : index
      %c0_29 = arith.constant 0 : index
      %167 = vector.load %arg6[%c0_28, %c0_29] : memref<8x256xf32, #tpu.memory_space<vmem>>, vector<8x256xf32>
      tpu.vector_store %arg6[%c0_28, %c0_29], %166 {strides = array<i32>} : memref<8x256xf32, #tpu.memory_space<vmem>>, vector<8x256xf32>,
    } else {
    }
    %c0 = arith.constant 0 : index
    %c0_1 = arith.constant 0 : index
    %3 = vector.load %arg2[%c0, %c0_1] : memref<8x4xf32, #tpu.memory_space<vmem>>, vector<8x4xf32>
    %c0_2 = arith.constant 0 : index
    %c0_3 = arith.constant 0 : index
    %4 = vector.load %arg3[%c0_2, %c0_3] : memref<8x4xf32, #tpu.memory_space<vmem>>, vector<8x4xf32>
    %5 = vector.extract_strided_slice %4 {offsets = [0, 0], sizes = [8, 1], strides = [1, 1]} : vector<8x4xf32> to vector<8x1xf32>
    %cst = arith.constant 0.000000e+00 : f32
    %6 = vector.broadcast %cst : f32 to vector<8x1xf32>
    %7 = arith.cmpf olt, %5, %6 : vector<8x1xf32>
    %cst_4 = arith.constant 0.000000e+00 : f32
    %8 = vector.broadcast %cst_4 : f32 to vector<8x4xf32>
    %9 = arith.subf %8, %4 : vector<8x4xf32>
    %10 = vector.shape_cast %7 : vector<8x1xi1> to vector<8x1xi1>
    %11 = vector.broadcast %10 : vector<8x1xi1> to vector<8x4xi1>
    %12 = arith.select %11, %9, %4 : vector<8x4xi1>, vector<8x4xf32>
    %13 = vector.extract_strided_slice %3 {offsets = [0, 0], sizes = [8, 1], strides = [1, 1]} : vector<8x4xf32> to vector<8x1xf32>
    %14 = vector.extract_strided_slice %3 {offsets = [0, 1], sizes = [8, 1], strides = [1, 1]} : vector<8x4xf32> to vector<8x1xf32>
    %15 = vector.extract_strided_slice %3 {offsets = [0, 2], sizes = [8, 1], strides = [1, 1]} : vector<8x4xf32> to vector<8x1xf32>
    %16 = vector.extract_strided_slice %3 {offsets = [0, 3], sizes = [8, 1], strides = [1, 1]} : vector<8x4xf32> to vector<8x1xf32>
    %17 = arith.mulf %3, %3 : vector<8x4xf32>
    %cst_5 = arith.constant dense<0.000000e+00> : vector<8xf32>
    %18 = vector.multi_reduction <add>, %17, %cst_5 [1] : vector<8x4xf32> to vector<8xf32>
    %19 = vector.shape_cast %18 : vector<8xf32> to vector<8x1xf32>
    %cst_6 = arith.constant 2.000000e+00 : f32
    %20 = vector.broadcast %cst_6 : f32 to vector<8x1xf32>
    %21 = arith.divf %20, %19 : vector<8x1xf32>
    %22 = arith.mulf %15, %15 : vector<8x1xf32>
    %23 = arith.mulf %16, %16 : vector<8x1xf32>
    %24 = arith.addf %22, %23 : vector<8x1xf32>
    %25 = arith.mulf %21, %24 : vector<8x1xf32>
    %cst_7 = arith.constant 1.000000e+00 : f32
    %26 = vector.broadcast %cst_7 : f32 to vector<8x1xf32>
    %27 = arith.subf %26, %25 : vector<8x1xf32>
    %28 = arith.mulf %14, %15 : vector<8x1xf32>
    %29 = arith.mulf %16, %13 : vector<8x1xf32>
    %30 = arith.subf %28, %29 : vector<8x1xf32>
    %31 = arith.mulf %21, %30 : vector<8x1xf32>
    %32 = arith.mulf %14, %16 : vector<8x1xf32>
    %33 = arith.mulf %15, %13 : vector<8x1xf32>
    %34 = arith.addf %32, %33 : vector<8x1xf32>
    %35 = arith.mulf %21, %34 : vector<8x1xf32>
    %36 = arith.mulf %14, %15 : vector<8x1xf32>
    %37 = arith.mulf %16, %13 : vector<8x1xf32>
    %38 = arith.addf %36, %37 : vector<8x1xf32>
    %39 = arith.mulf %21, %38 : vector<8x1xf32>
    %40 = arith.mulf %14, %14 : vector<8x1xf32>
    %41 = arith.mulf %16, %16 : vector<8x1xf32>
    %42 = arith.addf %40, %41 : vector<8x1xf32>
    %43 = arith.mulf %21, %42 : vector<8x1xf32>
    %cst_8 = arith.constant 1.000000e+00 : f32
    %44 = vector.broadcast %cst_8 : f32 to vector<8x1xf32>
    %45 = arith.subf %44, %43 : vector<8x1xf32>
    %46 = arith.mulf %15, %16 : vector<8x1xf32>
    %47 = arith.mulf %14, %13 : vector<8x1xf32>
    %48 = arith.subf %46, %47 : vector<8x1xf32>
    %49 = arith.mulf %21, %48 : vector<8x1xf32>
    %50 = arith.mulf %14, %16 : vector<8x1xf32>
    %51 = arith.mulf %15, %13 : vector<8x1xf32>
    %52 = arith.subf %50, %51 : vector<8x1xf32>
    %53 = arith.mulf %21, %52 : vector<8x1xf32>
    %54 = arith.mulf %15, %16 : vector<8x1xf32>
    %55 = arith.mulf %14, %13 : vector<8x1xf32>
    %56 = arith.addf %54, %55 : vector<8x1xf32>
    %57 = arith.mulf %21, %56 : vector<8x1xf32>
    %58 = arith.mulf %14, %14 : vector<8x1xf32>
    %59 = arith.mulf %15, %15 : vector<8x1xf32>
    %60 = arith.addf %58, %59 : vector<8x1xf32>
    %61 = arith.mulf %21, %60 : vector<8x1xf32>
    %cst_9 = arith.constant 1.000000e+00 : f32
    %62 = vector.broadcast %cst_9 : f32 to vector<8x1xf32>
    %63 = arith.subf %62, %61 : vector<8x1xf32>
    %64 = vector.extract_strided_slice %12 {offsets = [0, 0], sizes = [8, 1], strides = [1, 1]} : vector<8x4xf32> to vector<8x1xf32>
    %65 = vector.extract_strided_slice %12 {offsets = [0, 1], sizes = [8, 1], strides = [1, 1]} : vector<8x4xf32> to vector<8x1xf32>
    %66 = vector.extract_strided_slice %12 {offsets = [0, 2], sizes = [8, 1], strides = [1, 1]} : vector<8x4xf32> to vector<8x1xf32>
    %67 = vector.extract_strided_slice %12 {offsets = [0, 3], sizes = [8, 1], strides = [1, 1]} : vector<8x4xf32> to vector<8x1xf32>
    %68 = arith.mulf %12, %12 : vector<8x4xf32>
    %cst_10 = arith.constant dense<0.000000e+00> : vector<8xf32>
    %69 = vector.multi_reduction <add>, %68, %cst_10 [1] : vector<8x4xf32> to vector<8xf32>
    %70 = vector.shape_cast %69 : vector<8xf32> to vector<8x1xf32>
    %cst_11 = arith.constant 2.000000e+00 : f32
    %71 = vector.broadcast %cst_11 : f32 to vector<8x1xf32>
    %72 = arith.divf %71, %70 : vector<8x1xf32>
    %73 = arith.mulf %66, %66 : vector<8x1xf32>
    %74 = arith.mulf %67, %67 : vector<8x1xf32>
    %75 = arith.addf %73, %74 : vector<8x1xf32>
    %76 = arith.mulf %72, %75 : vector<8x1xf32>
    %cst_12 = arith.constant 1.000000e+00 : f32
    %77 = vector.broadcast %cst_12 : f32 to vector<8x1xf32>
    %78 = arith.subf %77, %76 : vector<8x1xf32>
    %79 = arith.mulf %65, %66 : vector<8x1xf32>
    %80 = arith.mulf %67, %64 : vector<8x1xf32>
    %81 = arith.subf %79, %80 : vector<8x1xf32>
    %82 = arith.mulf %72, %81 : vector<8x1xf32>
    %83 = arith.mulf %65, %67 : vector<8x1xf32>
    %84 = arith.mulf %66, %64 : vector<8x1xf32>
    %85 = arith.addf %83, %84 : vector<8x1xf32>
    %86 = arith.mulf %72, %85 : vector<8x1xf32>
    %87 = arith.mulf %65, %66 : vector<8x1xf32>
    %88 = arith.mulf %67, %64 : vector<8x1xf32>
    %89 = arith.addf %87, %88 : vector<8x1xf32>
    %90 = arith.mulf %72, %89 : vector<8x1xf32>
    %91 = arith.mulf %65, %65 : vector<8x1xf32>
    %92 = arith.mulf %67, %67 : vector<8x1xf32>
    %93 = arith.addf %91, %92 : vector<8x1xf32>
    %94 = arith.mulf %72, %93 : vector<8x1xf32>
    %cst_13 = arith.constant 1.000000e+00 : f32
    %95 = vector.broadcast %cst_13 : f32 to vector<8x1xf32>
    %96 = arith.subf %95, %94 : vector<8x1xf32>
    %97 = arith.mulf %66, %67 : vector<8x1xf32>
    %98 = arith.mulf %65, %64 : vector<8x1xf32>
    %99 = arith.subf %97, %98 : vector<8x1xf32>
    %100 = arith.mulf %72, %99 : vector<8x1xf32>
    %101 = arith.mulf %65, %67 : vector<8x1xf32>
    %102 = arith.mulf %66, %64 : vector<8x1xf32>
    %103 = arith.subf %101, %102 : vector<8x1xf32>
    %104 = arith.mulf %72, %103 : vector<8x1xf32>
    %105 = arith.mulf %66, %67 : vector<8x1xf32>
    %106 = arith.mulf %65, %64 : vector<8x1xf32>
    %107 = arith.addf %105, %106 : vector<8x1xf32>
    %108 = arith.mulf %72, %107 : vector<8x1xf32>
    %109 = arith.mulf %65, %65 : vector<8x1xf32>
    %110 = arith.mulf %66, %66 : vector<8x1xf32>
    %111 = arith.addf %109, %110 : vector<8x1xf32>
    %112 = arith.mulf %72, %111 : vector<8x1xf32>
    %cst_14 = arith.constant 1.000000e+00 : f32
    %113 = vector.broadcast %cst_14 : f32 to vector<8x1xf32>
    %114 = arith.subf %113, %112 : vector<8x1xf32>
    %115 = arith.subf %27, %78 : vector<8x1xf32>
    %116 = arith.subf %31, %82 : vector<8x1xf32>
    %117 = arith.subf %35, %86 : vector<8x1xf32>
    %118 = arith.subf %39, %90 : vector<8x1xf32>
    %119 = arith.subf %45, %96 : vector<8x1xf32>
    %120 = arith.subf %49, %100 : vector<8x1xf32>
    %121 = arith.subf %53, %104 : vector<8x1xf32>
    %122 = arith.subf %57, %108 : vector<8x1xf32>
    %123 = arith.subf %63, %114 : vector<8x1xf32>
    %c0_15 = arith.constant 0 : index
    %c0_16 = arith.constant 0 : index
    %c0_17 = arith.constant 0 : index
    %124 = vector.load %arg4[%c0_15, %c0_16, %c0_17] : memref<3x8x256xf32, #tpu.memory_space<vmem>>, vector<1x8x256xf32>
    %125 = vector.shape_cast %124 : vector<1x8x256xf32> to vector<8x256xf32>
    %c1 = arith.constant 1 : index
    %c0_18 = arith.constant 0 : index
    %c0_19 = arith.constant 0 : index
    %126 = vector.load %arg4[%c1, %c0_18, %c0_19] : memref<3x8x256xf32, #tpu.memory_space<vmem>>, vector<1x8x256xf32>
    %127 = vector.shape_cast %126 : vector<1x8x256xf32> to vector<8x256xf32>
    %c2 = arith.constant 2 : index
    %c0_20 = arith.constant 0 : index
    %c0_21 = arith.constant 0 : index
    %128 = vector.load %arg4[%c2, %c0_20, %c0_21] : memref<3x8x256xf32, #tpu.memory_space<vmem>>, vector<1x8x256xf32>
    %129 = vector.shape_cast %128 : vector<1x8x256xf32> to vector<8x256xf32>
    %130 = vector.broadcast %115 : vector<8x1xf32> to vector<8x256xf32>
    %131 = arith.mulf %125, %130 : vector<8x256xf32>
    %132 = vector.broadcast %118 : vector<8x1xf32> to vector<8x256xf32>
    %133 = arith.mulf %127, %132 : vector<8x256xf32>
    %134 = arith.addf %131, %133 : vector<8x256xf32>
    %135 = vector.broadcast %121 : vector<8x1xf32> to vector<8x256xf32>
    %136 = arith.mulf %129, %135 : vector<8x256xf32>
    %137 = arith.addf %134, %136 : vector<8x256xf32>
    %138 = vector.broadcast %116 : vector<8x1xf32> to vector<8x256xf32>
    %139 = arith.mulf %125, %138 : vector<8x256xf32>
    %140 = vector.broadcast %119 : vector<8x1xf32> to vector<8x256xf32>
    %141 = arith.mulf %127, %140 : vector<8x256xf32>
    %142 = arith.addf %139, %141 : vector<8x256xf32>
    %143 = vector.broadcast %122 : vector<8x1xf32> to vector<8x256xf32>
    %144 = arith.mulf %129, %143 : vector<8x256xf32>
    %145 = arith.addf %142, %144 : vector<8x256xf32>
    %146 = vector.broadcast %117 : vector<8x1xf32> to vector<8x256xf32>
    %147 = arith.mulf %125, %146 : vector<8x256xf32>
    %148 = vector.broadcast %120 : vector<8x1xf32> to vector<8x256xf32>
    %149 = arith.mulf %127, %148 : vector<8x256xf32>
    %150 = arith.addf %147, %149 : vector<8x256xf32>
    %151 = vector.broadcast %123 : vector<8x1xf32> to vector<8x256xf32>
    %152 = arith.mulf %129, %151 : vector<8x256xf32>
    %153 = arith.addf %150, %152 : vector<8x256xf32>
    %154 = arith.mulf %137, %137 : vector<8x256xf32>
    %155 = arith.mulf %145, %145 : vector<8x256xf32>
    %156 = arith.addf %154, %155 : vector<8x256xf32>
    %157 = arith.mulf %153, %153 : vector<8x256xf32>
    %158 = arith.addf %156, %157 : vector<8x256xf32>
    %159 = math.sqrt %158 : vector<8x256xf32>
    %c0_22 = arith.constant 0 : index
    %c0_23 = arith.constant 0 : index
    %160 = vector.load %arg6[%c0_22, %c0_23] : memref<8x256xf32, #tpu.memory_space<vmem>>, vector<8x256xf32>
    %161 = arith.addf %160, %159 : vector<8x256xf32>
    %c0_24 = arith.constant 0 : index
    %c0_25 = arith.constant 0 : index
    %162 = vector.load %arg6[%c0_24, %c0_25] : memref<8x256xf32, #tpu.memory_space<vmem>>, vector<8x256xf32>
    tpu.vector_store %arg6[%c0_24, %c0_25], %161 {strides = array<i32>} : memref<8x256xf32, #tpu.memory_space<vmem>>, vector<8x256xf32>,
    %c1_i32 = arith.constant 1 : i32
    %163 = arith.cmpi eq, %arg1, %c1_i32 : i32
    %164 = arith.extui %163 : i1 to i32
    %c0_i32_26 = arith.constant 0 : i32
    %165 = arith.cmpi ne, %164, %c0_i32_26 : i32
    scf.if %165 {
      %c0_27 = arith.constant 0 : index
      %c0_28 = arith.constant 0 : index
      %166 = vector.load %arg6[%c0_27, %c0_28] : memref<8x256xf32, #tpu.memory_space<vmem>>, vector<8x256xf32>
      %167 = vector.shape_cast %166 : vector<8x256xf32> to vector<1x8x256xf32>
      %cst_29 = arith.constant dense<0.000000e+00> : vector<1xf32>
      %168 = vector.multi_reduction <add>, %167, %cst_29 [1, 2] : vector<1x8x256xf32> to vector<1xf32>
      %169 = vector.shape_cast %168 : vector<1xf32> to vector<1x1x1xf32>
      %170 = vector.extract %169[0, 0, 0] : f32 from vector<1x1x1xf32>
      %171 = vector.broadcast %170 : f32 to vector<1x1xf32>
      %172 = vector.shape_cast %171 : vector<1x1xf32> to vector<1x1xf32>
      %173 = vector.broadcast %172 : vector<1x1xf32> to vector<8x128xf32>
      %c0_30 = arith.constant 0 : index
      %c0_31 = arith.constant 0 : index
      %174 = vector.load %arg5[%c0_30, %c0_31] : memref<8x128xf32, #tpu.memory_space<vmem>>, vector<8x128xf32>
      tpu.vector_store %arg5[%c0_30, %c0_31], %173 {strides = array<i32>} : memref<8x128xf32, #tpu.memory_space<vmem>>, vector<8x128xf32>,
    } else {
    }
    return
  }
  func.func @transform_0(%arg0: i32, %arg1: i32) -> (i32, i32) {
    %c0_i32 = arith.constant 0 : i32
    %c0_i32_0 = arith.constant 0 : i32
    return %arg0, %c0_i32 : i32, i32
  }
  func.func @transform_1(%arg0: i32, %arg1: i32) -> (i32, i32) {
    %c0_i32 = arith.constant 0 : i32
    %c0_i32_0 = arith.constant 0 : i32
    return %arg0, %c0_i32 : i32, i32
  }
  func.func @transform_2(%arg0: i32, %arg1: i32) -> (i32, i32, i32) {
    %c0_i32 = arith.constant 0 : i32
    %c0_i32_0 = arith.constant 0 : i32
    return %c0_i32, %arg0, %arg1 : i32, i32, i32
  }
  func.func @transform_3(%arg0: i32, %arg1: i32) -> (i32, i32) {
    %c0_i32 = arith.constant 0 : i32
    %c0_i32_0 = arith.constant 0 : i32
    return %arg0, %c0_i32 : i32, i32
  }
}

</mosaic_0001>

<llo_original>
// kernel: tpu_custom_call.1
$region0: #{tpu_custom_call.1}
  #allocation0 [shape = 'u32[]', space=smem, size = 0x4, offset = 0x4, fixed_abs, tag = 'smem constant byte address 0x4 - core index']
  #allocation1 [shape = 'u32[72,128]{1,0:T(1,128)}', space=vmem, size = 0x9000, scoped, tag = 'internal scratch']
  #allocation2 [shape = 'f32[8,256]{1,0:T(8,128)}', space=vmem, size = 0x2000, scoped, tag = 'scratch operand']
  %s0 = inlined_call_operand.vmem [shape: f32[16,4], index: 0, kind: input, shape index: {}]
  %s1 = inlined_call_operand.vmem [shape: f32[16,4], index: 1, kind: input, shape index: {}]
  %s2 = inlined_call_operand.hbm [shape: f32[3,16,512], index: 2, kind: input, shape index: {}]
  %s3 = inlined_call_operand.hbm [shape: f32[16,128], index: 3, kind: output, shape index: {}]
  %s4 = sld [smem:[#allocation0]]
  $region57: #{tpu_custom_call.1} parent=0
    _
  %s6 = ssub.s32 1, %s4
  %s7 = scalar_select 0, %s6, %s4
  $region1: #{tpu_custom_call.1} parent=0
    #allocation3 [shape = 'u8[49152]{0}', space=vmem, size = 0xc000, scoped, tag = 'input window, operand 2']
    #allocation4 [shape = 's32[2]{0}', space=sflag, size = 0x8, scoped, tag = 'scoped memory for tpu_custom_call.1']
    #allocation5 [shape = 's32[2]{0}', space=sflag, size = 0x8, scoped, tag = 'scoped memory for tpu_custom_call.1']
    #allocation6 [shape = 'u8[8192]{0}', space=vmem, size = 0x2000, scoped, tag = 'output window, operand 0']
    %8 = vsyncpa [#allocation4], 0
    %s9 = scalar_lea.sflag [#allocation4], 1
    %10 = vsyncpa %s9, 0
    %11 = vsyncpa [#allocation5], 0
    %s12 = scalar_lea.sflag [#allocation5], 1
    %13 = vsyncpa %s12, 0
    loop: start=0, step=1, limit=6
    $region2: #{tpu_custom_call.1} parent=1 // loop_pre_header
      _
    $region3: #{tpu_custom_call.1} parent=1 // loop_header
      %s15 = sphi 0, %s19
      %p16 = scmp.ge.s32.totalorder %s15, 6
      %s22 = sphi 0, %s34
      %s23 = sphi 0, %s30
      %s24 = sphi 0, %s22
      %s25 = sphi 0, %s23
      %s26 = sphi 0, %s24
      %s27 = sphi 0, %s25
      %s37 = sphi 0, %s39
      %s40 = sphi 0, %s37
      %s41 = sphi 0, %s40
      %s57 = sphi 0, %s41
      %s63 = sphi 0, %s65
      %s66 = sphi 0, %s63
      %s67 = sphi 0, %s66
      %s83 = sphi 0, %s67
      %s91 = sphi 0, %s93
      %s94 = sphi 0, %s91
      %s95 = sphi 0, %s94
      %s111 = sphi 0, %s95
      %s117 = sphi 0, %s119
      %s120 = sphi 0, %s117
      %s121 = sphi 0, %s120
      %s137 = sphi 0, %s121
    $region4: #{tpu_custom_call.1} parent=1 // loop_header_branch
      %18 = sbr.rel (%p16) target = $region8
    $region5: #{tpu_custom_call.1} parent=1 // loop_body
      %s20 = ssub.s32 %s15, 1
      %s21 = ssub.s32 %s15, 2
      %s28 = sadd.s32 1, %s23
      %p29 = scmp.ge.s32.totalorder %s28, 2
      %s30 = scalar_select %p29, 0, %s28
      %s31 = sadd.s32 1, %s22
      %s32 = scalar_select %p29, %s31, %s22
      %p33 = scmp.ge.s32.totalorder %s32, 2
      %s34 = scalar_select %p33, 0, %s32
      %s35 = ssub.s32 %s22, %s34
      %p36 = scmp.eq.s32.totalorder %s35, 0
      %s38 = sadd.s32 %s37, 1
      %s39 = scalar_select %p36, %s37, %s38
      %p42 = pneg %p36
      %p43 = scmp.eq.s32.totalorder %s15, 3
      %p44 = por %p42, %p43
      %p45 = scmp.ne.s32.totalorder %s37, %s40
      %p46 = scmp.eq.s32.totalorder %s15, 0
      %p47 = por %p45, %p46
      %p48 = scmp.ne.s32.totalorder %s37, %s40
      %p49 = scmp.eq.s32.totalorder %s20, 3
      %p50 = por %p48, %p49
      %p51 = scmp.ne.s32.totalorder %s40, %s41
      %p52 = scmp.eq.s32.totalorder %s20, 0
      %p53 = por %p51, %p52
      %p54 = scmp.ne.s32.totalorder %s40, %s41
      %p55 = scmp.eq.s32.totalorder %s21, 3
      %p56 = por %p54, %p55
      %p58 = scmp.ne.s32.totalorder %s41, %s57
      %p59 = scmp.eq.s32.totalorder %s21, 0
      %p60 = por %p58, %p59
      %s61 = ssub.s32 %s22, %s34
      %p62 = scmp.eq.s32.totalorder %s61, 0
      %s64 = sadd.s32 %s63, 1
      %s65 = scalar_select %p62, %s63, %s64
      %p68 = pneg %p62
      %p69 = scmp.eq.s32.totalorder %s15, 3
      %p70 = por %p68, %p69
      %p71 = scmp.ne.s32.totalorder %s63, %s66
      %p72 = scmp.eq.s32.totalorder %s15, 0
      %p73 = por %p71, %p72
      %p74 = scmp.ne.s32.totalorder %s63, %s66
      %p75 = scmp.eq.s32.totalorder %s20, 3
      %p76 = por %p74, %p75
      %p77 = scmp.ne.s32.totalorder %s66, %s67
      %p78 = scmp.eq.s32.totalorder %s20, 0
      %p79 = por %p77, %p78
      %p80 = scmp.ne.s32.totalorder %s66, %s67
      %p81 = scmp.eq.s32.totalorder %s21, 3
      %p82 = por %p80, %p81
      %p84 = scmp.ne.s32.totalorder %s67, %s83
      %p85 = scmp.eq.s32.totalorder %s21, 0
      %p86 = por %p84, %p85
      %s87 = ssub.s32 %s22, %s34
      %s88 = ssub.s32 %s23, %s30
      %s89 = sor.u32 %s87, %s88
      %p90 = scmp.eq.s32.totalorder %s89, 0
      %s92 = sadd.s32 %s91, 1
      %s93 = scalar_select %p90, %s91, %s92
      %p96 = pneg %p90
      %p97 = scmp.eq.s32.totalorder %s15, 3
      %p98 = por %p96, %p97
      %p99 = scmp.ne.s32.totalorder %s91, %s94
      %p100 = scmp.eq.s32.totalorder %s15, 0
      %p101 = por %p99, %p100
      %p102 = scmp.ne.s32.totalorder %s91, %s94
      %p103 = scmp.eq.s32.totalorder %s20, 3
      %p104 = por %p102, %p103
      %p105 = scmp.ne.s32.totalorder %s94, %s95
      %p106 = scmp.eq.s32.totalorder %s20, 0
      %p107 = por %p105, %p106
      %p108 = scmp.ne.s32.totalorder %s94, %s95
      %p109 = scmp.eq.s32.totalorder %s21, 3
      %p110 = por %p108, %p109
      %p112 = scmp.ne.s32.totalorder %s95, %s111
      %p113 = scmp.eq.s32.totalorder %s21, 0
      %p114 = por %p112, %p113
      %s115 = ssub.s32 %s22, %s34
      %p116 = scmp.eq.s32.totalorder %s115, 0
      %s118 = sadd.s32 %s117, 1
      %s119 = scalar_select %p116, %s117, %s118
      %p122 = pneg %p116
      %p123 = scmp.eq.s32.totalorder %s15, 3
      %p124 = por %p122, %p123
      %p125 = scmp.ne.s32.totalorder %s117, %s120
      %p126 = scmp.eq.s32.totalorder %s15, 0
      %p127 = por %p125, %p126
      %p128 = scmp.ne.s32.totalorder %s117, %s120
      %p129 = scmp.eq.s32.totalorder %s20, 3
      %p130 = por %p128, %p129
      %p131 = scmp.ne.s32.totalorder %s120, %s121
      %p132 = scmp.eq.s32.totalorder %s20, 0
      %p133 = por %p131, %p132
      %p134 = scmp.ne.s32.totalorder %s120, %s121
      %p135 = scmp.eq.s32.totalorder %s21, 3
      %p136 = por %p134, %p135
      %p138 = scmp.ne.s32.totalorder %s121, %s137
      %p139 = scmp.eq.s32.totalorder %s21, 0
      %p140 = por %p138, %p139
      %p141 = scmp.le.s32.totalorder 1, %s15
      %p142 = scmp.lt.s32.totalorder %s15, 5
      %p143 = pnand %p141, %p142
      %p144 = pneg %p143
      // Predicated region
      $region9: #{tpu_custom_call.1} parent=5 // pred_check
        _
      $region10: #{tpu_custom_call.1} parent=5 // pred_check_branch
        %146 = sbr.rel (%p143) target = $region12
      $region11: #{tpu_custom_call.1} parent=5 // pred_region
        %s147 = ssub.s32 %s15, 1
      $region12: #{tpu_custom_call.1} parent=5 // pred_fallthru
        _
      %p148 = scmp.lt.s32.totalorder %s15, 4
      // Predicated region
      $region13: #{tpu_custom_call.1} parent=5 // pred_check
        %p149 = pneg %p148
      $region14: #{tpu_custom_call.1} parent=5 // pred_check_branch
        %151 = sbr.rel (%p149) target = $region16
      $region15: #{tpu_custom_call.1} parent=5 // pred_region
        // Predicated region
        $region17: #{tpu_custom_call.1} parent=15 // pred_check
          %p152 = pneg %p47
        $region18: #{tpu_custom_call.1} parent=15 // pred_check_branch
          %154 = sbr.rel (%p152) target = $region20
        $region19: #{tpu_custom_call.1} parent=15 // pred_region
          %p155 = scmp.lt.s32.totalorder %s22, 1
          %s156 = scalar_select %p155, %s22, 1
          %s157 = smul.addr %s156, 8
          %s158 = scalar_lea.vmem %s0, %s157
        $region20: #{tpu_custom_call.1} parent=15 // pred_fallthru
          _
        // Predicated region
        $region21: #{tpu_custom_call.1} parent=15 // pred_check
          %p159 = pneg %p73
        $region22: #{tpu_custom_call.1} parent=15 // pred_check_branch
          %161 = sbr.rel (%p159) target = $region24
        $region23: #{tpu_custom_call.1} parent=15 // pred_region
          %p162 = scmp.lt.s32.totalorder %s22, 1
          %s163 = scalar_select %p162, %s22, 1
          %s164 = smul.addr %s163, 8
          %s165 = scalar_lea.vmem %s1, %s164
        $region24: #{tpu_custom_call.1} parent=15 // pred_fallthru
          _
        // Predicated region
        $region25: #{tpu_custom_call.1} parent=15 // pred_check
          %p166 = pneg %p101
        $region26: #{tpu_custom_call.1} parent=15 // pred_check_branch
          %168 = sbr.rel (%p166) target = $region28
        $region27: #{tpu_custom_call.1} parent=15 // pred_region
          %s169 = sand.u32 %s91, 1
          %s170 = scalar_lea.sflag [#allocation4], %s169
          %s171 = sand.u32 %s91, 1
          %s172 = smul.addr %s171, 48
          %s173 = scalar_lea.vmem [#allocation3], %s172
          %s174 = smul.u32 2, %s23
          %176 = vsyncadd %s170, 0
          %s177 = smul.addr %s22, 4
          %s178 = sadd.s32 %s174, %s177
          %s179 = smul.addr %s178, 8
          %s180 = scalar_lea.hbm %s2, %s179
          %s181 = sshll.u32 %s180, 4
          %s182 = int_to_ptr.hbm [resolvable:$true] %s181
          %s183 = sshll.u32 %s173, 4
          %s184 = int_to_ptr.vmem [resolvable:$true] %s183
          %189 = dma.hbm_to_vmem [thread:$0]  %s182, 768, %s184, %s170, 1024, 256, 16
        $region28: #{tpu_custom_call.1} parent=15 // pred_fallthru
          _
      $region16: #{tpu_custom_call.1} parent=5 // pred_fallthru
        _
      %p190 = scmp.le.s32.totalorder 1, %s15
      %p191 = scmp.lt.s32.totalorder %s15, 5
      %p192 = pnand %p190, %p191
      %p193 = pneg %p192
      // Predicated region
      $region29: #{tpu_custom_call.1} parent=5 // pred_check
        _
      $region30: #{tpu_custom_call.1} parent=5 // pred_check_branch
        %195 = sbr.rel (%p192) target = $region32
      $region31: #{tpu_custom_call.1} parent=5 // pred_region
        %s196 = ssub.s32 %s15, 1
        %s197 = sand.u32 %s94, 1
        %s198 = scalar_lea.sflag [#allocation4], %s197
        %s199 = sand.u32 %s94, 1
        %s200 = smul.addr %s199, 48
        %s201 = scalar_lea.vmem [#allocation3], %s200
        // Predicated region
        $region33: #{tpu_custom_call.1} parent=31 // pred_check
          %p202 = pneg %p107
        $region34: #{tpu_custom_call.1} parent=31 // pred_check_branch
          %204 = sbr.rel (%p202) target = $region36
        $region35: #{tpu_custom_call.1} parent=31 // pred_region
          %206 = dma.done %s198, 768
        $region36: #{tpu_custom_call.1} parent=31 // pred_fallthru
          _
        %p207 = scmp.lt.s32.totalorder %s24, 1
        %s208 = scalar_select %p207, %s24, 1
        %s209 = smul.addr %s208, 8
        %s210 = scalar_lea.vmem %s0, %s209
        %p211 = pneg %p53
        %p212 = pneg %p50
        %p213 = scmp.lt.s32.totalorder %s24, 1
        %s214 = scalar_select %p213, %s24, 1
        %s215 = smul.addr %s214, 8
        %s216 = scalar_lea.vmem %s1, %s215
        %p217 = pneg %p79
        %p218 = pneg %p76
        %s219 = sand.u32 %s94, 1
        %s220 = scalar_lea.sflag [#allocation4], %s219
        %s221 = sand.u32 %s94, 1
        %s222 = smul.addr %s221, 48
        %s223 = scalar_lea.vmem [#allocation3], %s222
        %p224 = pneg %p107
        %p225 = pneg %p104
        %p226 = pneg %p133
        %p227 = pneg %p130
        %s228 = sand.u32 %s120, 1
        %s229 = scalar_lea.sflag [#allocation5], %s228
        %s230 = sand.u32 %s120, 1
        %s231 = smul.addr %s230, 8
        %s232 = scalar_lea.vmem [#allocation6], %s231
        %p233 = scmp.lt.s32.totalorder %s24, 1
        %s234 = scalar_select %p233, %s24, 1
        %s235 = smul.addr %s234, 8
        %s236 = scalar_lea.vmem %s0, %s235
        %p237 = scmp.lt.s32.totalorder %s24, 1
        %s238 = scalar_select %p237, %s24, 1
        %s239 = smul.addr %s238, 8
        %s240 = scalar_lea.vmem %s1, %s239
        %s241 = smul.u32 2, %s25
        %p242 = scmp.eq.s32.totalorder %s25, 0
        // Predicated region
        $region37: #{tpu_custom_call.1} parent=31 // pred_check
          %p243 = pneg %p242
        $region38: #{tpu_custom_call.1} parent=31 // pred_check_branch
          %245 = sbr.rel (%p243) target = $region40
        $region39: #{tpu_custom_call.1} parent=31 // pred_region
          %246 = vst [vmem:[#allocation2] sm:$0xff] 0.0
          %247 = vst [vmem:[#allocation2 + $0x8] sm:$0xff] 0.0
        $region40: #{tpu_custom_call.1} parent=31 // pred_fallthru
          _
        %v248 = vld [vmem:[%s236] sm:$0xff]
        %v249 = vld [vmem:[%s240] sm:$0xff]
        %vm250 = vcmp.lt.f32.partialorder %v249, 0.0
        %v251 = vsub.f32 0.0, %v249
        %v252 = vsel %vm250, 1, 0
        %253 = vset.pattern.permute.xlu0 0
        %254 = vperm.xlu0 %253, %v252
        %v255 = vpop.permute.xlu0 %254
        %vm256 = vcmp.eq.s32.totalorder %v255, 1
        %v257 = vsel %vm256, %v251, %v249
        %v258 = vmul.f32 %v248, %v248
        %vm259 = vcmask 31744
        %v260 = vsel %vm259, %v258, 0.0
        %261 = vadd.xlane.f32.xlu0 %v260
        %v262 = vpop.xlane.xlu0 %261
        %v263 = vrcp.pop %v262
        %v264 = vmul.f32 %v262, %v263
        %v265 = vsub.f32 1.0, %v264
        %v266 = vmul.f32 %v263, %v265
        %v267 = vadd.f32 %v263, %v266
        %vm268 = vweird.f32 %v262
        %vm269 = vweird.f32 %v263
        %vm270 = vmor %vm268, %vm269
        %v271 = vsel %vm270, %v263, %v267
        %v272 = vand.u32 2147483647, %v262
        %vm273 = vcmp.eq.f32.partialorder %v272, 8.507059e+37
        %v274 = vand.u32 %v262, 2147483648
        %v275 = vor.u32 1.1754944e-38, %v274
        %v276 = vsel %vm273, %v275, %v271
        %v277 = vmul.f32 2.0, %v276
        %279 = vrot.lane.b32.xlu0 %v258, 127
        %v280 = vpop.permute.xlu0 %279
        %v282 = vadd.f32 %v258, %v280
        %v283 = vmul.f32 %v277, %v282
        %v284 = vsub.f32 1.0, %v283
        %286 = vrot.lane.b32.xlu0 %v248, 127
        %v287 = vpop.permute.xlu0 %286
        %v289 = vmul.f32 %v248, %v287
        %290 = vrot.lane.b32.xlu0 %v248, 3
        %v291 = vpop.permute.xlu0 %290
        %v293 = vmul.f32 %v248, %v291
        %295 = vrot.lane.b32.xlu0 %v293, 126
        %v296 = vpop.permute.xlu0 %295
        %v298 = vsub.f32 %v289, %v296
        %v299 = vmul.f32 %v277, %v298
        %300 = vrot.lane.b32.xlu0 %v248, 126
        %v301 = vpop.permute.xlu0 %300
        %v303 = vmul.f32 %v248, %v301
        %304 = vrot.lane.b32.xlu0 %v248, 2
        %v305 = vpop.permute.xlu0 %304
        %v307 = vmul.f32 %v248, %v305
        %309 = vrot.lane.b32.xlu0 %v307, 127
        %v310 = vpop.permute.xlu0 %309
        %v312 = vadd.f32 %v303, %v310
        %v313 = vmul.f32 %v277, %v312
        %v314 = vadd.f32 %v289, %v296
        %v315 = vmul.f32 %v277, %v314
        %316 = vrot.lane.b32.xlu0 %v258, 126
        %v317 = vpop.permute.xlu0 %316
        %v319 = vadd.f32 %v258, %v317
        %v320 = vmul.f32 %v277, %v319
        %v321 = vsub.f32 1.0, %v320
        %322 = vrot.lane.b32.xlu0 %v248, 1
        %v323 = vpop.permute.xlu0 %322
        %v325 = vmul.f32 %v248, %v323
        %327 = vrot.lane.b32.xlu0 %v325, 1
        %v328 = vpop.permute.xlu0 %327
        %v330 = vsub.f32 %v289, %v328
        %v331 = vmul.f32 %v277, %v330
        %v332 = vsub.f32 %v303, %v310
        %v333 = vmul.f32 %v277, %v332
        %v334 = vadd.f32 %v289, %v328
        %v335 = vmul.f32 %v277, %v334
        %v336 = vmul.f32 %v257, %v257
        %v337 = vsel %vm259, %v336, 0.0
        %338 = vadd.xlane.f32.xlu0 %v337
        %v339 = vpop.xlane.xlu0 %338
        %v340 = vrcp.pop %v339
        %v341 = vmul.f32 %v339, %v340
        %v342 = vsub.f32 1.0, %v341
        %v343 = vmul.f32 %v340, %v342
        %v344 = vadd.f32 %v340, %v343
        %vm345 = vweird.f32 %v339
        %vm346 = vweird.f32 %v340
        %vm347 = vmor %vm345, %vm346
        %v348 = vsel %vm347, %v340, %v344
        %v349 = vand.u32 2147483647, %v339
        %vm350 = vcmp.eq.f32.partialorder %v349, 8.507059e+37
        %v351 = vand.u32 %v339, 2147483648
        %v352 = vor.u32 1.1754944e-38, %v351
        %v353 = vsel %vm350, %v352, %v348
        %v354 = vmul.f32 2.0, %v353
        %356 = vrot.lane.b32.xlu0 %v336, 127
        %v357 = vpop.permute.xlu0 %356
        %v359 = vadd.f32 %v336, %v357
        %v360 = vmul.f32 %v354, %v359
        %v361 = vsub.f32 1.0, %v360
        %363 = vrot.lane.b32.xlu0 %v257, 127
        %v364 = vpop.permute.xlu0 %363
        %v366 = vmul.f32 %v257, %v364
        %367 = vrot.lane.b32.xlu0 %v257, 3
        %v368 = vpop.permute.xlu0 %367
        %v370 = vmul.f32 %v257, %v368
        %372 = vrot.lane.b32.xlu0 %v370, 126
        %v373 = vpop.permute.xlu0 %372
        %v375 = vsub.f32 %v366, %v373
        %v376 = vmul.f32 %v354, %v375
        %377 = vrot.lane.b32.xlu0 %v257, 126
        %v378 = vpop.permute.xlu0 %377
        %v380 = vmul.f32 %v257, %v378
        %381 = vrot.lane.b32.xlu0 %v257, 2
        %v382 = vpop.permute.xlu0 %381
        %v384 = vmul.f32 %v257, %v382
        %386 = vrot.lane.b32.xlu0 %v384, 127
        %v387 = vpop.permute.xlu0 %386
        %v389 = vadd.f32 %v380, %v387
        %v390 = vmul.f32 %v354, %v389
        %v391 = vadd.f32 %v366, %v373
        %v392 = vmul.f32 %v354, %v391
        %393 = vrot.lane.b32.xlu0 %v336, 126
        %v394 = vpop.permute.xlu0 %393
        %v396 = vadd.f32 %v336, %v394
        %v397 = vmul.f32 %v354, %v396
        %v398 = vsub.f32 1.0, %v397
        %399 = vrot.lane.b32.xlu0 %v257, 1
        %v400 = vpop.permute.xlu0 %399
        %v402 = vmul.f32 %v257, %v400
        %404 = vrot.lane.b32.xlu0 %v402, 1
        %v405 = vpop.permute.xlu0 %404
        %v407 = vsub.f32 %v366, %v405
        %v408 = vmul.f32 %v354, %v407
        %v409 = vsub.f32 %v380, %v387
        %v410 = vmul.f32 %v354, %v409
        %v411 = vadd.f32 %v366, %v405
        %v412 = vmul.f32 %v354, %v411
        %v413 = vsub.f32 %v284, %v361
        %v414 = vsub.f32 %v299, %v376
        %v415 = vsub.f32 %v313, %v390
        %v416 = vsub.f32 %v315, %v392
        %v417 = vsub.f32 %v321, %v398
        %v418 = vsub.f32 %v331, %v408
        %v419 = vsub.f32 %v333, %v410
        %v420 = vsub.f32 %v335, %v412
        %v421 = vld [vmem:[%s201] sm:$0xff]
        %v422 = vld [vmem:[%s201 + $0x8] sm:$0xff]
        %s423 = scalar_lea.vmem %s201, 16 [#allocation3]
        %v424 = vld [vmem:[%s423] sm:$0xff]
        %v425 = vld [vmem:[%s423 + $0x8] sm:$0xff]
        %s426 = scalar_lea.vmem %s201, 32 [#allocation3]
        %v427 = vld [vmem:[%s426] sm:$0xff]
        %v428 = vld [vmem:[%s426 + $0x8] sm:$0xff]
        %430 = vset.pattern.permute.xlu0 2
        %431 = vperm.xlu0 %430, %v413
        %v432 = vpop.permute.xlu0 %431
        %v434 = vmul.f32 %v421, %v432
        %v435 = vmul.f32 %v422, %v432
        %437 = vset.pattern.permute.xlu0 1
        %438 = vperm.xlu0 %437, %v416
        %v439 = vpop.permute.xlu0 %438
        %v441 = vmul.f32 %v424, %v439
        %v442 = vmul.f32 %v425, %v439
        %v443 = vadd.f32 %v434, %v441
        %v444 = vadd.f32 %v435, %v442
        %446 = vset.pattern.permute.xlu0 1
        %447 = vperm.xlu0 %446, %v419
        %v448 = vpop.permute.xlu0 %447
        %v450 = vmul.f32 %v427, %v448
        %v451 = vmul.f32 %v428, %v448
        %v452 = vadd.f32 %v443, %v450
        %v453 = vadd.f32 %v444, %v451
        %455 = vset.pattern.permute.xlu0 1
        %456 = vperm.xlu0 %455, %v414
        %v457 = vpop.permute.xlu0 %456
        %v459 = vmul.f32 %v421, %v457
        %v460 = vmul.f32 %v422, %v457
        %462 = vset.pattern.permute.xlu0 1
        %463 = vperm.xlu0 %462, %v417
        %v464 = vpop.permute.xlu0 %463
        %v466 = vmul.f32 %v424, %v464
        %v467 = vmul.f32 %v425, %v464
        %v468 = vadd.f32 %v459, %v466
        %v469 = vadd.f32 %v460, %v467
        %471 = vset.pattern.permute.xlu0 2
        %472 = vperm.xlu0 %471, %v420
        %v473 = vpop.permute.xlu0 %472
        %v475 = vmul.f32 %v427, %v473
        %v476 = vmul.f32 %v428, %v473
        %v477 = vadd.f32 %v468, %v475
        %v478 = vadd.f32 %v469, %v476
        %480 = vset.pattern.permute.xlu0 1
        %481 = vperm.xlu0 %480, %v415
        %v482 = vpop.permute.xlu0 %481
        %v484 = vmul.f32 %v421, %v482
        %v485 = vmul.f32 %v422, %v482
        %487 = vset.pattern.permute.xlu0 2
        %488 = vperm.xlu0 %487, %v418
        %v489 = vpop.permute.xlu0 %488
        %v491 = vmul.f32 %v424, %v489
        %v492 = vmul.f32 %v425, %v489
        %v493 = vadd.f32 %v484, %v491
        %v494 = vadd.f32 %v485, %v492
        %495 = vset.pattern.permute.xlu0 1
        %496 = vperm.xlu0 %495, %v413
        %v497 = vpop.permute.xlu0 %496
        %v499 = vmul.f32 %v427, %v497
        %v500 = vmul.f32 %v428, %v497
        %v501 = vadd.f32 %v493, %v499
        %v502 = vadd.f32 %v494, %v500
        %v503 = vmul.f32 %v452, %v452
        %v504 = vmul.f32 %v453, %v453
        %v505 = vmul.f32 %v477, %v477
        %v506 = vmul.f32 %v478, %v478
        %v507 = vadd.f32 %v503, %v505
        %v508 = vadd.f32 %v504, %v506
        %v509 = vmul.f32 %v501, %v501
        %v510 = vmul.f32 %v502, %v502
        %v511 = vadd.f32 %v507, %v509
        %v512 = vadd.f32 %v508, %v510
        %v513 = vrsqrt.pop %v511
        %v514 = vmul.f32 %v513, %v511
        %v515 = vmul.f32 %v514, %v513
        %v516 = vmul.f32 0.5, %v515
        %v517 = vsub.f32 1.5, %v516
        %v518 = vmul.f32 %v513, %v517
        %v519 = vmul.f32 %v511, %v518
        %vm520 = vcmp.eq.f32.partialorder %v511, inf
        %v521 = vsel %vm520, %v511, %v519
        %vm522 = vcmp.eq.f32.partialorder %v511, 0.0
        %v523 = vand.u32 %v511, 2147483648
        %v524 = vsel %vm522, %v523, %v521
        %v525 = vrsqrt.pop %v512
        %v526 = vmul.f32 %v525, %v512
        %v527 = vmul.f32 %v526, %v525
        %v528 = vmul.f32 0.5, %v527
        %v529 = vsub.f32 1.5, %v528
        %v530 = vmul.f32 %v525, %v529
        %v531 = vmul.f32 %v512, %v530
        %vm532 = vcmp.eq.f32.partialorder %v512, inf
        %v533 = vsel %vm532, %v512, %v531
        %vm534 = vcmp.eq.f32.partialorder %v512, 0.0
        %v535 = vand.u32 %v512, 2147483648
        %v536 = vsel %vm534, %v535, %v533
        %v537 = vld [vmem:[#allocation2] sm:$0xff]
        %v538 = vld [vmem:[#allocation2 + $0x8] sm:$0xff]
        %v539 = vadd.f32 %v537, %v524
        %v540 = vadd.f32 %v538, %v536
        %541 = vst [vmem:[#allocation2] sm:$0xff] %v539
        %542 = vst [vmem:[#allocation2 + $0x8] sm:$0xff] %v540
        %p543 = scmp.eq.s32.totalorder %s25, 1
        // Predicated region
        $region41: #{tpu_custom_call.1} parent=31 // pred_check
          %p544 = pneg %p543
        $region42: #{tpu_custom_call.1} parent=31 // pred_check_branch
          %546 = sbr.rel (%p544) target = $region44
        $region43: #{tpu_custom_call.1} parent=31 // pred_region
          %v547 = vld [vmem:[#allocation2] sm:$0xff]
          %v548 = vld [vmem:[#allocation2 + $0x8] sm:$0xff]
          %v549 = vadd.f32 %v547, %v548
          %550 = vadd.xlane.f32.xlu0 %v549
          %v551 = vpop.xlane.xlu0 %550
          %v552 = vrot.slane %v551, 4
          %v553 = vadd.f32 %v551, %v552
          %v554 = vrot.slane %v553, 2
          %v555 = vadd.f32 %v553, %v554
          %v556 = vrot.slane %v555, 1
          %v557 = vadd.f32 %v555, %v556
          %s558 = vtos %v557
          %v559 = vstv %s558
          %560 = vst [vmem:[%s232] sm:$0xff] %v559
        $region44: #{tpu_custom_call.1} parent=31 // pred_fallthru
          _
        %s561 = sand.u32 %s120, 1
        %s562 = scalar_lea.sflag [#allocation5], %s561
        %s563 = sand.u32 %s120, 1
        %s564 = smul.addr %s563, 8
        %s565 = scalar_lea.vmem [#allocation6], %s564
        // Predicated region
        $region45: #{tpu_custom_call.1} parent=31 // pred_check
          %p566 = pneg %p130
        $region46: #{tpu_custom_call.1} parent=31 // pred_check_branch
          %568 = sbr.rel (%p566) target = $region48
        $region47: #{tpu_custom_call.1} parent=31 // pred_region
          %570 = vsyncadd %s562, 0
          %s571 = smul.addr %s24, 8
          %s572 = scalar_lea.hbm %s3, %s571
          %s574 = sshll.u32 %s565, 4
          %s575 = int_to_ptr.vmem [resolvable:$true] %s574
          %s576 = sshll.u32 %s572, 4
          %s577 = int_to_ptr.hbm [resolvable:$true] %s576
          %579 = dma.vmem_to_hbm [thread:$0]  %s575, 128, %s577, %s562
        $region48: #{tpu_custom_call.1} parent=31 // pred_fallthru
          _
      $region32: #{tpu_custom_call.1} parent=5 // pred_fallthru
        _
      %p580 = scmp.le.s32.totalorder 2, %s15
      // Predicated region
      $region49: #{tpu_custom_call.1} parent=5 // pred_check
        %p581 = pneg %p580
      $region50: #{tpu_custom_call.1} parent=5 // pred_check_branch
        %583 = sbr.rel (%p581) target = $region52
      $region51: #{tpu_custom_call.1} parent=5 // pred_region
        %s584 = ssub.s32 %s15, 2
        // Predicated region
        $region53: #{tpu_custom_call.1} parent=51 // pred_check
          %p585 = pneg %p136
        $region54: #{tpu_custom_call.1} parent=51 // pred_check_branch
          %587 = sbr.rel (%p585) target = $region56
        $region55: #{tpu_custom_call.1} parent=51 // pred_region
          %s588 = sand.u32 %s121, 1
          %s589 = scalar_lea.sflag [#allocation5], %s588
          %s590 = sand.u32 %s121, 1
          %s591 = smul.addr %s590, 8
          %s592 = scalar_lea.vmem [#allocation6], %s591
          %594 = dma.done %s589, 128
        $region56: #{tpu_custom_call.1} parent=51 // pred_fallthru
          _
      $region52: #{tpu_custom_call.1} parent=5 // pred_fallthru
        _
    $region6: #{tpu_custom_call.1} parent=1 // loop_footer
      %s19 = sadd.s32 1, %s15
    $region7: #{tpu_custom_call.1} parent=1 // loop_footer_branch
      %14 = sbr.rel target = $region3
    $region8: #{tpu_custom_call.1} parent=1 // loop_exit
      _
    %595 = vsyncpa [#allocation4], 1
    %s596 = scalar_lea.sflag [#allocation4], 1
    %597 = vsyncpa %s596, 1
    %598 = vsyncpa [#allocation5], 1
    %s599 = scalar_lea.sflag [#allocation5], 1
    %600 = vsyncpa %s599, 1

</llo_original>
